<compile_context>
chip_gen: v6e
topology: v6e:2x2x1
jax: 0.10.0
libtpu: 0.0.40
codegen_flags: <defaults>
</compile_context>

<pallas_src>
import jax
import jax.numpy as jnp
from jax.experimental import pallas as pl
from jax.experimental.pallas import tpu as pltpu


def mlp_kernel(xt_ref, w1_ref, b1_ref, w2_ref, b2_ref, w3_ref, b3_ref, o_ref):
    xt = xt_ref[...]                                              # (D, tb) bf16, lane-dense

    # Layer 1 (MXU): W1 (64, D) @ x_t (D, tb) -> (64, tb), f32 accumulation.
    h1 = jnp.dot(w1_ref[...], xt, preferred_element_type=jnp.float32)
    h1 = jnp.maximum(h1 + b1_ref[...], 0.0)                       # bias (64, 1) f32

    # Layer 2 (MXU): W2 (32, 64) @ h1 -> (32, tb), f32 accumulation.
    h2 = jnp.dot(w2_ref[...], h1.astype(jnp.bfloat16),
                 preferred_element_type=jnp.float32)
    h2 = jnp.maximum(h2 + b2_ref[...], 0.0)                       # bias (32, 1) f32

    # Layer 3 (VPU + XLU): an N=1 MXU pass is <1% utilization, so do a broadcast
    # multiply by the (32, 1) weight column + sublane reduction instead; scalar
    # bias comes from SMEM.  Result is a lane-dense (1, tb) row.
    out = jnp.sum(h2 * w3_ref[...], axis=0, keepdims=True) + b3_ref[0, 0]
    o_ref[...] = out.astype(o_ref.dtype)


def _num_tensorcores_per_chip():
    """2 TensorCores per chip on v7x, 1 on v5e/v6e.  Defaults to 1."""
    try:
        kind = jax.devices()[0].device_kind.lower()
    except Exception:
        return 1
    return 2 if ("v7" in kind or "tpu7" in kind) else 1


def _pick_tiling(B, ntc, tb_max=8192):
    """Largest tile (cap 8192 rows, multiple of 128) and the minimum step count;
    on 2-TC chips keep the step count a multiple of the core count."""
    tb = min(tb_max, 128 * pl.cdiv(pl.cdiv(B, max(ntc, 1)), 128))
    grid_b = pl.cdiv(B, tb)
    if ntc > 1 and grid_b > 1 and grid_b % ntc:
        grid_b += ntc - (grid_b % ntc)        # even split across TensorCores
    return tb, grid_b


def mlp_forward_t(xt, params, *, tb):
    """Core entry.  xt: (D, B_pad) bfloat16, already transposed (features x batch),
    with B_pad a multiple of tb (tb a multiple of 128).  Returns (1, B_pad) f32.
    Producers that already hold bf16 (D, B) activations can call this directly
    and skip the wrapper pass over x."""
    D, b_pad = xt.shape
    assert tb % 128 == 0 and b_pad % tb == 0
    grid_b = b_pad // tb

    w1 = params["w1"].astype(jnp.bfloat16)   # (64, D)
    b1 = params["b1"]                        # (64, 1) f32
    w2 = params["w2"].astype(jnp.bfloat16)   # (32, 64)
    b2 = params["b2"]                        # (32, 1) f32
    w3 = params["w3"]                        # (32, 1) f32
    b3 = params["b3"]                        # (1, 1)  f32  -> SMEM scalar

    def full(a):
        return pl.BlockSpec(a.shape, lambda i: (0,) * a.ndim)

    flops = 2 * b_pad * (D * 64 + 64 * 32 + 32)
    bytes_accessed = int(
        xt.size * 2 + b_pad * 4
        + w1.size * 2 + w2.size * 2
        + (b1.size + b2.size + w3.size + b3.size) * 4)

    return pl.pallas_call(
        mlp_kernel,
        out_shape=jax.ShapeDtypeStruct((1, b_pad), jnp.float32),
        grid_spec=pltpu.PrefetchScalarGridSpec(
            num_scalar_prefetch=0,
            grid=(grid_b,),
            in_specs=[
                pl.BlockSpec((D, tb), lambda i: (0, i)),               # x_t stream
                full(w1), full(b1), full(w2), full(b2), full(w3),      # resident
                pl.BlockSpec(memory_space=pltpu.MemorySpace.SMEM),     # b3 scalar
            ],
            out_specs=pl.BlockSpec((1, tb), lambda i: (0, i)),         # lane-dense
        ),
        compiler_params=pltpu.CompilerParams(
            dimension_semantics=("parallel",),
        ),
        cost_estimate=pl.CostEstimate(
            flops=flops, transcendentals=0, bytes_accessed=bytes_accessed),
    )(xt, w1, b1, w2, b2, w3, b3)


def mlp_forward(x, params, *, tb=None):
    """x: (B, D) float32.  params: kernel-layout weights (see init_params)."""
    B, D = x.shape
    ntc = _num_tensorcores_per_chip()
    if tb is None:
        tb, grid_b = _pick_tiling(B, ntc)
    else:
        assert tb % 128 == 0
        grid_b = pl.cdiv(B, tb)
    b_pad = grid_b * tb

    # transpose + bf16 cast + pad fuse into a single XLA pass over x
    # (one f32 read + one bf16 write; the kernel then reads bf16 once).
    xt = x.T.astype(jnp.bfloat16)
    if b_pad != B:
        xt = jnp.pad(xt, ((0, 0), (0, b_pad - B)))

    out = mlp_forward_t(xt, params, tb=tb)
    return out[0, :B].reshape(B, 1)


def init_params(key, input_dim):
    """PyTorch nn.Linear default init (U(-1/sqrt(fan_in), +)), kernel layouts:
       w1:(64,D) w2:(32,64) like torch's (out,in); w3 stored as a (32,1) column;
       biases as (out,1) columns and b3 as a (1,1) scalar (SMEM)."""
    dims = [(input_dim, 64), (64, 32), (32, 1)]
    params = {}
    keys = jax.random.split(key, 2 * len(dims))
    for idx, (fan_in, fan_out) in enumerate(dims):
        bound = 1.0 / (fan_in ** 0.5)
        w = jax.random.uniform(keys[2 * idx], (fan_out, fan_in),
                               minval=-bound, maxval=bound, dtype=jnp.float32)
        b = jax.random.uniform(keys[2 * idx + 1], (fan_out, 1),
                               minval=-bound, maxval=bound, dtype=jnp.float32)
        params[f"w{idx + 1}"] = w
        params[f"b{idx + 1}"] = b
    params["w3"] = params["w3"].reshape(32, 1)   # column for the VPU layer-3 path
    params["b3"] = params["b3"].reshape(1, 1)    # (1, 1) scalar bias -> SMEM
    return params


def mlp_reference(x, params, *, emulate_bf16=True):
    """Pure-JAX reference.  emulate_bf16=True mirrors the kernel's quantization
    (x, W1, W2 and the inter-layer activation rounded to bf16, math in f32)."""
    cast = ((lambda a: a.astype(jnp.bfloat16).astype(jnp.float32))
            if emulate_bf16 else (lambda a: a))
    h = jnp.maximum(cast(x) @ cast(params["w1"]).T + params["b1"].T, 0.0)
    h = jnp.maximum(cast(h) @ cast(params["w2"]).T + params["b2"].T, 0.0)
    return h @ params["w3"] + params["b3"]


if __name__ == "__main__":
    key = jax.random.PRNGKey(0)
    k_param, k_x = jax.random.split(key)

    B, D = 1000, 16      # small; exercises padding and the per-TC grid sizing
    params = init_params(k_param, D)
    x = jax.random.normal(k_x, (B, D), dtype=jnp.float32)

    out = jax.block_until_ready(mlp_forward(x, params))
    assert out.shape == (B, 1)

    ref_emul = mlp_reference(x, params, emulate_bf16=True)   # same math as kernel
    ref_f32 = mlp_reference(x, params, emulate_bf16=False)   # full-precision sanity
    assert jnp.allclose(out, ref_emul, atol=2e-3, rtol=2e-3)
    assert jnp.allclose(out, ref_f32, atol=5e-2, rtol=5e-2)

    print("KERNEL_OK")
</pallas_src>

<mosaic_0001>
module attributes {stable_mosaic.version = 11 : i64} {
  func.func @mlp_kernel(%arg0: i32, %arg1: memref<16x1024xbf16, #tpu.memory_space<vmem>>, %arg2: memref<64x16xbf16, #tpu.memory_space<vmem>>, %arg3: memref<64x1xf32, #tpu.memory_space<vmem>>, %arg4: memref<32x64xbf16, #tpu.memory_space<vmem>>, %arg5: memref<32x1xf32, #tpu.memory_space<vmem>>, %arg6: memref<32x1xf32, #tpu.memory_space<vmem>>, %arg7: memref<1x1xf32, #tpu.memory_space<smem>>, %arg8: memref<1x1024xf32, #tpu.memory_space<vmem>>) attributes {dimension_semantics = [#tpu.dimension_semantics<parallel>], iteration_bounds = array<i64: 1>, scalar_prefetch = 0 : i64, scratch_operands = 0 : i64, tpu.core_type = #tpu.core_type<tc>, window_params = [{transform_indices = @transform_0, window_bounds = array<i64: 16, 1024>}, {pipeline_mode = #tpu.pipeline_mode<synchronous>, transform_indices = @transform_1, window_bounds = array<i64: 64, 16>}, {pipeline_mode = #tpu.pipeline_mode<synchronous>, transform_indices = @transform_2, window_bounds = array<i64: 64, 1>}, {pipeline_mode = #tpu.pipeline_mode<synchronous>, transform_indices = @transform_3, window_bounds = array<i64: 32, 64>}, {pipeline_mode = #tpu.pipeline_mode<synchronous>, transform_indices = @transform_4, window_bounds = array<i64: 32, 1>}, {pipeline_mode = #tpu.pipeline_mode<synchronous>, transform_indices = @transform_5, window_bounds = array<i64: 32, 1>}, {transform_indices = @transform_6, window_bounds = array<i64: 1, 1>}, {transform_indices = @transform_7, window_bounds = array<i64: 1, 1024>}]} {
    %c0 = arith.constant 0 : index
    %c0_0 = arith.constant 0 : index
    %0 = vector.load %arg1[%c0, %c0_0] : memref<16x1024xbf16, #tpu.memory_space<vmem>>, vector<16x1024xbf16>
    %c0_1 = arith.constant 0 : index
    %c0_2 = arith.constant 0 : index
    %1 = vector.load %arg2[%c0_1, %c0_2] : memref<64x16xbf16, #tpu.memory_space<vmem>>, vector<64x16xbf16>
    %cst = arith.constant dense<0.000000e+00> : vector<64x1024xf32>
    %2 = tpu.matmul %1, %0, %cst {dimension_numbers = #tpu.dot_dimension_numbers<[1], [0], [0], [1], [0, 0, 1, 1], [], []>} : vector<64x16xbf16>, vector<16x1024xbf16>, vector<64x1024xf32> -> vector<64x1024xf32>
    %c0_3 = arith.constant 0 : index
    %c0_4 = arith.constant 0 : index
    %3 = vector.load %arg3[%c0_3, %c0_4] : memref<64x1xf32, #tpu.memory_space<vmem>>, vector<64x1xf32>
    %4 = vector.broadcast %3 : vector<64x1xf32> to vector<64x1024xf32>
    %5 = arith.addf %2, %4 : vector<64x1024xf32>
    %cst_5 = arith.constant 0.000000e+00 : f32
    %6 = vector.broadcast %cst_5 : f32 to vector<64x1024xf32>
    %7 = arith.maximumf %5, %6 : vector<64x1024xf32>
    %c0_6 = arith.constant 0 : index
    %c0_7 = arith.constant 0 : index
    %8 = vector.load %arg4[%c0_6, %c0_7] : memref<32x64xbf16, #tpu.memory_space<vmem>>, vector<32x64xbf16>
    %9 = arith.truncf %7 : vector<64x1024xf32> to vector<64x1024xbf16>
    %cst_8 = arith.constant dense<0.000000e+00> : vector<32x1024xf32>
    %10 = tpu.matmul %8, %9, %cst_8 {dimension_numbers = #tpu.dot_dimension_numbers<[1], [0], [0], [1], [0, 0, 1, 1], [], []>} : vector<32x64xbf16>, vector<64x1024xbf16>, vector<32x1024xf32> -> vector<32x1024xf32>
    %c0_9 = arith.constant 0 : index
    %c0_10 = arith.constant 0 : index
    %11 = vector.load %arg5[%c0_9, %c0_10] : memref<32x1xf32, #tpu.memory_space<vmem>>, vector<32x1xf32>
    %12 = vector.broadcast %11 : vector<32x1xf32> to vector<32x1024xf32>
    %13 = arith.addf %10, %12 : vector<32x1024xf32>
    %cst_11 = arith.constant 0.000000e+00 : f32
    %14 = vector.broadcast %cst_11 : f32 to vector<32x1024xf32>
    %15 = arith.maximumf %13, %14 : vector<32x1024xf32>
    %c0_12 = arith.constant 0 : index
    %c0_13 = arith.constant 0 : index
    %16 = vector.load %arg6[%c0_12, %c0_13] : memref<32x1xf32, #tpu.memory_space<vmem>>, vector<32x1xf32>
    %17 = vector.broadcast %16 : vector<32x1xf32> to vector<32x1024xf32>
    %18 = arith.mulf %15, %17 : vector<32x1024xf32>
    %cst_14 = arith.constant dense<0.000000e+00> : vector<1024xf32>
    %19 = vector.multi_reduction <add>, %18, %cst_14 [0] : vector<32x1024xf32> to vector<1024xf32>
    %20 = vector.shape_cast %19 : vector<1024xf32> to vector<1x1024xf32>
    %c0_15 = arith.constant 0 : index
    %c0_16 = arith.constant 0 : index
    %21 = memref.load %arg7[%c0_15, %c0_16] : memref<1x1xf32, #tpu.memory_space<smem>>
    %22 = vector.broadcast %21 : f32 to vector<1x1024xf32>
    %23 = arith.addf %20, %22 : vector<1x1024xf32>
    %c0_17 = arith.constant 0 : index
    %c0_18 = arith.constant 0 : index
    %24 = vector.load %arg8[%c0_17, %c0_18] : memref<1x1024xf32, #tpu.memory_space<vmem>>, vector<1x1024xf32>
    tpu.vector_store %arg8[%c0_17, %c0_18], %23 {strides = array<i32>} : memref<1x1024xf32, #tpu.memory_space<vmem>>, vector<1x1024xf32>,
    return
  }
  func.func @transform_0(%arg0: i32) -> (i32, i32) {
    %c0_i32 = arith.constant 0 : i32
    %c0_i32_0 = arith.constant 0 : i32
    return %c0_i32, %arg0 : i32, i32
  }
  func.func @transform_1(%arg0: i32) -> (i32, i32) {
    %c0_i32 = arith.constant 0 : i32
    %c0_i32_0 = arith.constant 0 : i32
    %c0_i32_1 = arith.constant 0 : i32
    return %c0_i32, %c0_i32_0 : i32, i32
  }
  func.func @transform_2(%arg0: i32) -> (i32, i32) {
    %c0_i32 = arith.constant 0 : i32
    %c0_i32_0 = arith.constant 0 : i32
    %c0_i32_1 = arith.constant 0 : i32
    return %c0_i32, %c0_i32_0 : i32, i32
  }
  func.func @transform_3(%arg0: i32) -> (i32, i32) {
    %c0_i32 = arith.constant 0 : i32
    %c0_i32_0 = arith.constant 0 : i32
    %c0_i32_1 = arith.constant 0 : i32
    return %c0_i32, %c0_i32_0 : i32, i32
  }
  func.func @transform_4(%arg0: i32) -> (i32, i32) {
    %c0_i32 = arith.constant 0 : i32
    %c0_i32_0 = arith.constant 0 : i32
    %c0_i32_1 = arith.constant 0 : i32
    return %c0_i32, %c0_i32_0 : i32, i32
  }
  func.func @transform_5(%arg0: i32) -> (i32, i32) {
    %c0_i32 = arith.constant 0 : i32
    %c0_i32_0 = arith.constant 0 : i32
    %c0_i32_1 = arith.constant 0 : i32
    return %c0_i32, %c0_i32_0 : i32, i32
  }
  func.func @transform_6(%arg0: i32) -> (i32, i32) {
    %c0_i32 = arith.constant 0 : i32
    %c0_i32_0 = arith.constant 0 : i32
    %c0_i32_1 = arith.constant 0 : i32
    return %c0_i32, %c0_i32_0 : i32, i32
  }
  func.func @transform_7(%arg0: i32) -> (i32, i32) {
    %c0_i32 = arith.constant 0 : i32
    %c0_i32_0 = arith.constant 0 : i32
    return %c0_i32, %arg0 : i32, i32
  }
}

</mosaic_0001>

<llo_original>
// kernel: tpu_custom_call.1
$region0: #{tpu_custom_call.1}
  #allocation0 [shape = 'u32[]', space=smem, size = 0x4, offset = 0x4, fixed_abs, tag = 'smem constant byte address 0x4 - core index']
  #allocation1 [shape = 'u32[144,128]{1,0:T(1,128)}', space=vmem, size = 0x12000, scoped, tag = 'internal scratch']
  #allocation2 [shape = 'f32[1,1]{1,0:T(1,128)S(6)}', space=smem, size = 0x200, scoped, tag = 'scoped memory for tpu_custom_call.1']
  %s0 = inlined_call_operand.vmem [shape: bf16[16,1024], index: 0, kind: input, shape index: {}]
  %s1 = inlined_call_operand.vmem [shape: bf16[64,16], index: 1, kind: input, shape index: {}]
  %s2 = inlined_call_operand.vmem [shape: f32[64,1], index: 2, kind: input, shape index: {}]
  %s3 = inlined_call_operand.vmem [shape: bf16[32,64], index: 3, kind: input, shape index: {}]
  %s4 = inlined_call_operand.vmem [shape: f32[32,1], index: 4, kind: input, shape index: {}]
  %s5 = inlined_call_operand.vmem [shape: f32[32,1], index: 5, kind: input, shape index: {}]
  %s6 = inlined_call_operand.<no memory space> [shape: f32[1,1], index: 6, kind: input, shape index: {}]
  %s7 = inlined_call_operand.hbm [shape: f32[1,1024], index: 7, kind: output, shape index: {}]
  %s8 = sld [smem:[#allocation0]]
  $region38: #{tpu_custom_call.1} parent=0
    _
  %s10 = ssub.s32 1, %s8
  %s11 = scalar_select 0, %s10, %s8
  %12 = sst [smem:[#allocation2]] %s6
  $region1: #{tpu_custom_call.1} parent=0
    #allocation3 [shape = 'u8[4096]{0}', space=vmem, size = 0x1000, scoped, tag = 'output window, operand 0, single buffered']
    #allocation4 [shape = 's32[1]{0}', space=sflag, size = 0x4, scoped, tag = 'scoped memory for tpu_custom_call.1']
    %13 = vsyncpa [#allocation4], 0
    // Predicated region
    $region2: #{tpu_custom_call.1} parent=1 // pred_check
      _
    $region3: #{tpu_custom_call.1} parent=1 // pred_check_branch
      %15 = sbr.rel (0) target = $region5
    $region4: #{tpu_custom_call.1} parent=1 // pred_region
      _
    $region5: #{tpu_custom_call.1} parent=1 // pred_fallthru
      _
    // Predicated region
    $region6: #{tpu_custom_call.1} parent=1 // pred_check
      _
    $region7: #{tpu_custom_call.1} parent=1 // pred_check_branch
      %17 = sbr.rel (0) target = $region9
    $region8: #{tpu_custom_call.1} parent=1 // pred_region
      _
    $region9: #{tpu_custom_call.1} parent=1 // pred_fallthru
      _
    // Predicated region
    $region10: #{tpu_custom_call.1} parent=1 // pred_check
      _
    $region11: #{tpu_custom_call.1} parent=1 // pred_check_branch
      %19 = sbr.rel (0) target = $region13
    $region12: #{tpu_custom_call.1} parent=1 // pred_region
      _
    $region13: #{tpu_custom_call.1} parent=1 // pred_fallthru
      _
    // Predicated region
    $region14: #{tpu_custom_call.1} parent=1 // pred_check
      _
    $region15: #{tpu_custom_call.1} parent=1 // pred_check_branch
      %21 = sbr.rel (0) target = $region17
    $region16: #{tpu_custom_call.1} parent=1 // pred_region
      _
    $region17: #{tpu_custom_call.1} parent=1 // pred_fallthru
      _
    // Predicated region
    $region18: #{tpu_custom_call.1} parent=1 // pred_check
      _
    $region19: #{tpu_custom_call.1} parent=1 // pred_check_branch
      %23 = sbr.rel (0) target = $region21
    $region20: #{tpu_custom_call.1} parent=1 // pred_region
      _
    $region21: #{tpu_custom_call.1} parent=1 // pred_fallthru
      _
    // Predicated region
    $region22: #{tpu_custom_call.1} parent=1 // pred_check
      _
    $region23: #{tpu_custom_call.1} parent=1 // pred_check_branch
      %25 = sbr.rel (0) target = $region25
    $region24: #{tpu_custom_call.1} parent=1 // pred_region
      _
    $region25: #{tpu_custom_call.1} parent=1 // pred_fallthru
      _
    // Predicated region
    $region26: #{tpu_custom_call.1} parent=1 // pred_check
      _
    $region27: #{tpu_custom_call.1} parent=1 // pred_check_branch
      %27 = sbr.rel (0) target = $region29
    $region28: #{tpu_custom_call.1} parent=1 // pred_region
      _
    $region29: #{tpu_custom_call.1} parent=1 // pred_fallthru
      _
    %v29 = vld [vmem:[%s0] sm:$0xff]
    %v30 = vld [vmem:[%s0 + $0x8] sm:$0xff]
    %v31 = vld [vmem:[%s0 + $0x10] sm:$0xff]
    %v32 = vld [vmem:[%s0 + $0x18] sm:$0xff]
    %v33 = vld [vmem:[%s0 + $0x20] sm:$0xff]
    %v34 = vld [vmem:[%s0 + $0x28] sm:$0xff]
    %v35 = vld [vmem:[%s0 + $0x30] sm:$0xff]
    %v36 = vld [vmem:[%s0 + $0x38] sm:$0xff]
    %v37 = vld [vmem:[%s1] sm:$0xf]
    %v38 = vld [vmem:[%s1 + $0x4] sm:$0xf]
    %v39 = vld [vmem:[%s1 + $0x8] sm:$0xf]
    %v40 = vld [vmem:[%s1 + $0xc] sm:$0xf]
    %v41 = vld [vmem:[%s1 + $0x10] sm:$0xf]
    %v42 = vld [vmem:[%s1 + $0x14] sm:$0xf]
    %v43 = vld [vmem:[%s1 + $0x18] sm:$0xf]
    %v44 = vld [vmem:[%s1 + $0x1c] sm:$0xf]
    %v45 = vld [vmem:[%s2] sm:$0xff]
    %v46 = vld [vmem:[%s2 + $0x8] sm:$0xff]
    %v47 = vld [vmem:[%s2 + $0x10] sm:$0xff]
    %v48 = vld [vmem:[%s2 + $0x18] sm:$0xff]
    %v49 = vld [vmem:[%s2 + $0x20] sm:$0xff]
    %v50 = vld [vmem:[%s2 + $0x28] sm:$0xff]
    %v51 = vld [vmem:[%s2 + $0x30] sm:$0xff]
    %v52 = vld [vmem:[%s2 + $0x38] sm:$0xff]
    %54 = vset.pattern.permute.xlu0 0
    %55 = vperm.xlu0 %54, %v45
    %v56 = vpop.permute.xlu0 %55
    %59 = vset.pattern.permute.xlu0 0
    %60 = vperm.xlu0 %59, %v46
    %v61 = vpop.permute.xlu0 %60
    %64 = vset.pattern.permute.xlu0 0
    %65 = vperm.xlu0 %64, %v47
    %v66 = vpop.permute.xlu0 %65
    %69 = vset.pattern.permute.xlu0 0
    %70 = vperm.xlu0 %69, %v48
    %v71 = vpop.permute.xlu0 %70
    %74 = vset.pattern.permute.xlu0 0
    %75 = vperm.xlu0 %74, %v49
    %v76 = vpop.permute.xlu0 %75
    %79 = vset.pattern.permute.xlu0 0
    %80 = vperm.xlu0 %79, %v50
    %v81 = vpop.permute.xlu0 %80
    %84 = vset.pattern.permute.xlu0 0
    %85 = vperm.xlu0 %84, %v51
    %v86 = vpop.permute.xlu0 %85
    %89 = vset.pattern.permute.xlu0 0
    %90 = vperm.xlu0 %89, %v52
    %v91 = vpop.permute.xlu0 %90
    %v101 = vunpack.c.l.b16 %v37
    %v102 = vunpack.c.l.b16 %v38
    %v103 = vunpack.c.l.b16 %v39
    %v104 = vunpack.c.l.b16 %v40
    %v105 = vunpack.c.l.b16 %v41
    %v106 = vunpack.c.l.b16 %v42
    %v107 = vunpack.c.l.b16 %v43
    %v108 = vunpack.c.l.b16 %v44
    %v109 = vpack.c.b16 %v102, %v101
    %v110 = vpack.c.b16 %v104, %v103
    %v111 = vpack.c.b16 %v106, %v105
    %v112 = vpack.c.b16 %v108, %v107
    %v121 = vunpack.c.l.b16 %v29
    %v122 = vunpack.c.h.b16 %v29
    %v123 = vunpack.c.l.b16 %v30
    %v124 = vunpack.c.h.b16 %v30
    %v125 = vunpack.c.l.b16 %v31
    %v126 = vunpack.c.h.b16 %v31
    %v127 = vunpack.c.l.b16 %v32
    %v128 = vunpack.c.h.b16 %v32
    %v129 = vunpack.c.l.b16 %v33
    %v130 = vunpack.c.h.b16 %v33
    %v131 = vunpack.c.l.b16 %v34
    %v132 = vunpack.c.h.b16 %v34
    %v133 = vunpack.c.l.b16 %v35
    %v134 = vunpack.c.h.b16 %v35
    %v135 = vunpack.c.l.b16 %v36
    %v136 = vunpack.c.h.b16 %v36
    %v137 = vpack.c.b16 %v129, %v121
    %v138 = vpack.c.b16 %v130, %v122
    %v139 = vpack.c.b16 %v131, %v123
    %v140 = vpack.c.b16 %v132, %v124
    %v141 = vpack.c.b16 %v133, %v125
    %v142 = vpack.c.b16 %v134, %v126
    %v143 = vpack.c.b16 %v135, %v127
    %v144 = vpack.c.b16 %v136, %v128
    %vm153 = vcmask 130048
    %v155 = vsel %vm153, %v109, 0
    %v158 = vsel %vm153, %v110, 0
    %v161 = vsel %vm153, %v111, 0
    %v164 = vsel %vm153, %v112, 0
    %166 = vmatprep.subr.bf16.mxu0 0
    %167 = vmatpush1.bf16.msra.mxu0 0
    %168 = vmatprep.subr.bf16.mxu0 0
    %169 = vmatpush1.bf16.msra.mxu0 0
    %170 = vmatprep.subr.bf16.mxu0 0
    %171 = vmatpush1.bf16.msra.mxu0 0
    %172 = vmatprep.subr.bf16.mxu0 0
    %173 = vmatpush1.bf16.msra.mxu0 0
    %174 = vmatprep.subr.bf16.mxu0 0
    %175 = vmatpush1.bf16.msra.mxu0 0
    %176 = vmatprep.subr.bf16.mxu0 0
    %177 = vmatpush1.bf16.msra.mxu0 0
    %178 = vmatprep.subr.bf16.mxu0 0
    %179 = vmatpush1.bf16.msra.mxu0 0
    %180 = vmatprep.subr.bf16.mxu0 %v138
    %181 = vmatpush1.bf16.msra.mxu0 %v137
    %182 = vmatprep.subr.bf16.mxu0 0
    %183 = vmatpush2.bf16.msra.mxu0 0
    %184 = vmatprep.subr.bf16.mxu0 0
    %185 = vmatpush2.bf16.msra.mxu0 0
    %186 = vmatprep.subr.bf16.mxu0 0
    %187 = vmatpush2.bf16.msra.mxu0 0
    %188 = vmatprep.subr.bf16.mxu0 0
    %189 = vmatpush2.bf16.msra.mxu0 0
    %190 = vmatprep.subr.bf16.mxu0 0
    %191 = vmatpush2.bf16.msra.mxu0 0
    %192 = vmatprep.subr.bf16.mxu0 0
    %193 = vmatpush2.bf16.msra.mxu0 0
    %194 = vmatprep.subr.bf16.mxu0 0
    %195 = vmatpush2.bf16.msra.mxu0 0
    %196 = vmatprep.subr.bf16.mxu0 0
    %197 = vmatpush2.bf16.msra.mxu0 0
    %198 = vmatprep.mubr.bf16.mxu0 0
    %199 = vmatmul.mubr.bf16.gmra.mxu0 %v155
    %v200 = vpop.f32.mrf.mxu0
    %v201 = vadd.f32 %v56, %v200
    %v202 = vpop.f32.mrf.mxu0
    %v203 = vadd.f32 %v56, %v202
    %v204 = vpop.f32.mrf.mxu0
    %v205 = vadd.f32 %v61, %v204
    %v206 = vpop.f32.mrf.mxu0
    %v207 = vadd.f32 %v61, %v206
    %208 = vmatprep.mubr.bf16.mxu0 0
    %209 = vmatmul.mubr.bf16.gmra.mxu0 %v158
    %v210 = vpop.f32.mrf.mxu0
    %v211 = vadd.f32 %v66, %v210
    %v212 = vpop.f32.mrf.mxu0
    %v213 = vadd.f32 %v66, %v212
    %v214 = vpop.f32.mrf.mxu0
    %v215 = vadd.f32 %v71, %v214
    %v216 = vpop.f32.mrf.mxu0
    %v217 = vadd.f32 %v71, %v216
    %218 = vmatprep.mubr.bf16.mxu0 0
    %219 = vmatmul.mubr.bf16.gmra.mxu0 %v161
    %v220 = vpop.f32.mrf.mxu0
    %v221 = vadd.f32 %v76, %v220
    %v222 = vpop.f32.mrf.mxu0
    %v223 = vadd.f32 %v76, %v222
    %v224 = vpop.f32.mrf.mxu0
    %v225 = vadd.f32 %v81, %v224
    %v226 = vpop.f32.mrf.mxu0
    %v227 = vadd.f32 %v81, %v226
    %228 = vmatprep.mubr.bf16.mxu0 0
    %229 = vmatmul.mubr.bf16.gmra.mxu0 %v164
    %v230 = vpop.f32.mrf.mxu0
    %v231 = vadd.f32 %v86, %v230
    %v232 = vpop.f32.mrf.mxu0
    %v233 = vadd.f32 %v86, %v232
    %v234 = vpop.f32.mrf.mxu0
    %v235 = vadd.f32 %v91, %v234
    %v236 = vpop.f32.mrf.mxu0
    %v237 = vadd.f32 %v91, %v236
    %238 = vdwg.mxu0
    %239 = vmatprep.subr.bf16.mxu0 0
    %240 = vmatpush1.bf16.msra.mxu0 0
    %241 = vmatprep.subr.bf16.mxu0 0
    %242 = vmatpush1.bf16.msra.mxu0 0
    %243 = vmatprep.subr.bf16.mxu0 0
    %244 = vmatpush1.bf16.msra.mxu0 0
    %245 = vmatprep.subr.bf16.mxu0 0
    %246 = vmatpush1.bf16.msra.mxu0 0
    %247 = vmatprep.subr.bf16.mxu0 0
    %248 = vmatpush1.bf16.msra.mxu0 0
    %249 = vmatprep.subr.bf16.mxu0 0
    %250 = vmatpush1.bf16.msra.mxu0 0
    %251 = vmatprep.subr.bf16.mxu0 0
    %252 = vmatpush1.bf16.msra.mxu0 0
    %253 = vmatprep.subr.bf16.mxu0 %v140
    %254 = vmatpush1.bf16.msra.mxu0 %v139
    %255 = vmatprep.subr.bf16.mxu0 0
    %256 = vmatpush2.bf16.msra.mxu0 0
    %257 = vmatprep.subr.bf16.mxu0 0
    %258 = vmatpush2.bf16.msra.mxu0 0
    %259 = vmatprep.subr.bf16.mxu0 0
    %260 = vmatpush2.bf16.msra.mxu0 0
    %261 = vmatprep.subr.bf16.mxu0 0
    %262 = vmatpush2.bf16.msra.mxu0 0
    %263 = vmatprep.subr.bf16.mxu0 0
    %264 = vmatpush2.bf16.msra.mxu0 0
    %265 = vmatprep.subr.bf16.mxu0 0
    %266 = vmatpush2.bf16.msra.mxu0 0
    %267 = vmatprep.subr.bf16.mxu0 0
    %268 = vmatpush2.bf16.msra.mxu0 0
    %269 = vmatprep.subr.bf16.mxu0 0
    %270 = vmatpush2.bf16.msra.mxu0 0
    %271 = vmatprep.mubr.bf16.mxu0 0
    %272 = vmatmul.mubr.bf16.gmra.mxu0 %v155
    %v273 = vpop.f32.mrf.mxu0
    %v274 = vadd.f32 %v56, %v273
    %v275 = vpop.f32.mrf.mxu0
    %v276 = vadd.f32 %v56, %v275
    %v277 = vpop.f32.mrf.mxu0
    %v278 = vadd.f32 %v61, %v277
    %v279 = vpop.f32.mrf.mxu0
    %v280 = vadd.f32 %v61, %v279
    %281 = vmatprep.mubr.bf16.mxu0 0
    %282 = vmatmul.mubr.bf16.gmra.mxu0 %v158
    %v283 = vpop.f32.mrf.mxu0
    %v284 = vadd.f32 %v66, %v283
    %v285 = vpop.f32.mrf.mxu0
    %v286 = vadd.f32 %v66, %v285
    %v287 = vpop.f32.mrf.mxu0
    %v288 = vadd.f32 %v71, %v287
    %v289 = vpop.f32.mrf.mxu0
    %v290 = vadd.f32 %v71, %v289
    %291 = vmatprep.mubr.bf16.mxu0 0
    %292 = vmatmul.mubr.bf16.gmra.mxu0 %v161
    %v293 = vpop.f32.mrf.mxu0
    %v294 = vadd.f32 %v76, %v293
    %v295 = vpop.f32.mrf.mxu0
    %v296 = vadd.f32 %v76, %v295
    %v297 = vpop.f32.mrf.mxu0
    %v298 = vadd.f32 %v81, %v297
    %v299 = vpop.f32.mrf.mxu0
    %v300 = vadd.f32 %v81, %v299
    %301 = vmatprep.mubr.bf16.mxu0 0
    %302 = vmatmul.mubr.bf16.gmra.mxu0 %v164
    %v303 = vpop.f32.mrf.mxu0
    %v304 = vadd.f32 %v86, %v303
    %v305 = vpop.f32.mrf.mxu0
    %v306 = vadd.f32 %v86, %v305
    %v307 = vpop.f32.mrf.mxu0
    %v308 = vadd.f32 %v91, %v307
    %v309 = vpop.f32.mrf.mxu0
    %v310 = vadd.f32 %v91, %v309
    %311 = vdwg.mxu0
    %312 = vmatprep.subr.bf16.mxu0 0
    %313 = vmatpush1.bf16.msra.mxu0 0
    %314 = vmatprep.subr.bf16.mxu0 0
    %315 = vmatpush1.bf16.msra.mxu0 0
    %316 = vmatprep.subr.bf16.mxu0 0
    %317 = vmatpush1.bf16.msra.mxu0 0
    %318 = vmatprep.subr.bf16.mxu0 0
    %319 = vmatpush1.bf16.msra.mxu0 0
    %320 = vmatprep.subr.bf16.mxu0 0
    %321 = vmatpush1.bf16.msra.mxu0 0
    %322 = vmatprep.subr.bf16.mxu0 0
    %323 = vmatpush1.bf16.msra.mxu0 0
    %324 = vmatprep.subr.bf16.mxu0 0
    %325 = vmatpush1.bf16.msra.mxu0 0
    %326 = vmatprep.subr.bf16.mxu0 %v142
    %327 = vmatpush1.bf16.msra.mxu0 %v141
    %328 = vmatprep.subr.bf16.mxu0 0
    %329 = vmatpush2.bf16.msra.mxu0 0
    %330 = vmatprep.subr.bf16.mxu0 0
    %331 = vmatpush2.bf16.msra.mxu0 0
    %332 = vmatprep.subr.bf16.mxu0 0
    %333 = vmatpush2.bf16.msra.mxu0 0
    %334 = vmatprep.subr.bf16.mxu0 0
    %335 = vmatpush2.bf16.msra.mxu0 0
    %336 = vmatprep.subr.bf16.mxu0 0
    %337 = vmatpush2.bf16.msra.mxu0 0
    %338 = vmatprep.subr.bf16.mxu0 0
    %339 = vmatpush2.bf16.msra.mxu0 0
    %340 = vmatprep.subr.bf16.mxu0 0
    %341 = vmatpush2.bf16.msra.mxu0 0
    %342 = vmatprep.subr.bf16.mxu0 0
    %343 = vmatpush2.bf16.msra.mxu0 0
    %344 = vmatprep.mubr.bf16.mxu0 0
    %345 = vmatmul.mubr.bf16.gmra.mxu0 %v155
    %v346 = vpop.f32.mrf.mxu0
    %v347 = vadd.f32 %v56, %v346
    %v348 = vpop.f32.mrf.mxu0
    %v349 = vadd.f32 %v56, %v348
    %v350 = vpop.f32.mrf.mxu0
    %v351 = vadd.f32 %v61, %v350
    %v352 = vpop.f32.mrf.mxu0
    %v353 = vadd.f32 %v61, %v352
    %354 = vmatprep.mubr.bf16.mxu0 0
    %355 = vmatmul.mubr.bf16.gmra.mxu0 %v158
    %v356 = vpop.f32.mrf.mxu0
    %v357 = vadd.f32 %v66, %v356
    %v358 = vpop.f32.mrf.mxu0
    %v359 = vadd.f32 %v66, %v358
    %v360 = vpop.f32.mrf.mxu0
    %v361 = vadd.f32 %v71, %v360
    %v362 = vpop.f32.mrf.mxu0
    %v363 = vadd.f32 %v71, %v362
    %364 = vmatprep.mubr.bf16.mxu0 0
    %365 = vmatmul.mubr.bf16.gmra.mxu0 %v161
    %v366 = vpop.f32.mrf.mxu0
    %v367 = vadd.f32 %v76, %v366
    %v368 = vpop.f32.mrf.mxu0
    %v369 = vadd.f32 %v76, %v368
    %v370 = vpop.f32.mrf.mxu0
    %v371 = vadd.f32 %v81, %v370
    %v372 = vpop.f32.mrf.mxu0
    %v373 = vadd.f32 %v81, %v372
    %374 = vmatprep.mubr.bf16.mxu0 0
    %375 = vmatmul.mubr.bf16.gmra.mxu0 %v164
    %v376 = vpop.f32.mrf.mxu0
    %v377 = vadd.f32 %v86, %v376
    %v378 = vpop.f32.mrf.mxu0
    %v379 = vadd.f32 %v86, %v378
    %v380 = vpop.f32.mrf.mxu0
    %v381 = vadd.f32 %v91, %v380
    %v382 = vpop.f32.mrf.mxu0
    %v383 = vadd.f32 %v91, %v382
    %384 = vdwg.mxu0
    %385 = vmatprep.subr.bf16.mxu0 0
    %386 = vmatpush1.bf16.msra.mxu0 0
    %387 = vmatprep.subr.bf16.mxu0 0
    %388 = vmatpush1.bf16.msra.mxu0 0
    %389 = vmatprep.subr.bf16.mxu0 0
    %390 = vmatpush1.bf16.msra.mxu0 0
    %391 = vmatprep.subr.bf16.mxu0 0
    %392 = vmatpush1.bf16.msra.mxu0 0
    %393 = vmatprep.subr.bf16.mxu0 0
    %394 = vmatpush1.bf16.msra.mxu0 0
    %395 = vmatprep.subr.bf16.mxu0 0
    %396 = vmatpush1.bf16.msra.mxu0 0
    %397 = vmatprep.subr.bf16.mxu0 0
    %398 = vmatpush1.bf16.msra.mxu0 0
    %399 = vmatprep.subr.bf16.mxu0 %v144
    %400 = vmatpush1.bf16.msra.mxu0 %v143
    %401 = vmatprep.subr.bf16.mxu0 0
    %402 = vmatpush2.bf16.msra.mxu0 0
    %403 = vmatprep.subr.bf16.mxu0 0
    %404 = vmatpush2.bf16.msra.mxu0 0
    %405 = vmatprep.subr.bf16.mxu0 0
    %406 = vmatpush2.bf16.msra.mxu0 0
    %407 = vmatprep.subr.bf16.mxu0 0
    %408 = vmatpush2.bf16.msra.mxu0 0
    %409 = vmatprep.subr.bf16.mxu0 0
    %410 = vmatpush2.bf16.msra.mxu0 0
    %411 = vmatprep.subr.bf16.mxu0 0
    %412 = vmatpush2.bf16.msra.mxu0 0
    %413 = vmatprep.subr.bf16.mxu0 0
    %414 = vmatpush2.bf16.msra.mxu0 0
    %415 = vmatprep.subr.bf16.mxu0 0
    %416 = vmatpush2.bf16.msra.mxu0 0
    %417 = vmatprep.mubr.bf16.mxu0 0
    %418 = vmatmul.mubr.bf16.gmra.mxu0 %v155
    %v419 = vpop.f32.mrf.mxu0
    %v420 = vadd.f32 %v56, %v419
    %v421 = vpop.f32.mrf.mxu0
    %v422 = vadd.f32 %v56, %v421
    %v423 = vpop.f32.mrf.mxu0
    %v424 = vadd.f32 %v61, %v423
    %v425 = vpop.f32.mrf.mxu0
    %v426 = vadd.f32 %v61, %v425
    %427 = vmatprep.mubr.bf16.mxu0 0
    %428 = vmatmul.mubr.bf16.gmra.mxu0 %v158
    %v429 = vpop.f32.mrf.mxu0
    %v430 = vadd.f32 %v66, %v429
    %v431 = vpop.f32.mrf.mxu0
    %v432 = vadd.f32 %v66, %v431
    %v433 = vpop.f32.mrf.mxu0
    %v434 = vadd.f32 %v71, %v433
    %v435 = vpop.f32.mrf.mxu0
    %v436 = vadd.f32 %v71, %v435
    %437 = vmatprep.mubr.bf16.mxu0 0
    %438 = vmatmul.mubr.bf16.gmra.mxu0 %v161
    %v439 = vpop.f32.mrf.mxu0
    %v440 = vadd.f32 %v76, %v439
    %v441 = vpop.f32.mrf.mxu0
    %v442 = vadd.f32 %v76, %v441
    %v443 = vpop.f32.mrf.mxu0
    %v444 = vadd.f32 %v81, %v443
    %v445 = vpop.f32.mrf.mxu0
    %v446 = vadd.f32 %v81, %v445
    %447 = vmatprep.mubr.bf16.mxu0 0
    %448 = vmatmul.mubr.bf16.gmra.mxu0 %v164
    %v449 = vpop.f32.mrf.mxu0
    %v450 = vadd.f32 %v86, %v449
    %v451 = vpop.f32.mrf.mxu0
    %v452 = vadd.f32 %v86, %v451
    %v453 = vpop.f32.mrf.mxu0
    %v454 = vadd.f32 %v91, %v453
    %v455 = vpop.f32.mrf.mxu0
    %v456 = vadd.f32 %v91, %v455
    %457 = vdwg.mxu0
    %v458 = vmax.f32 %v201, 0.0
    %v459 = vmax.f32 %v203, 0.0
    %v460 = vmax.f32 %v274, 0.0
    %v461 = vmax.f32 %v276, 0.0
    %v462 = vmax.f32 %v347, 0.0
    %v463 = vmax.f32 %v349, 0.0
    %v464 = vmax.f32 %v420, 0.0
    %v465 = vmax.f32 %v422, 0.0
    %v466 = vmax.f32 %v205, 0.0
    %v467 = vmax.f32 %v207, 0.0
    %v468 = vmax.f32 %v278, 0.0
    %v469 = vmax.f32 %v280, 0.0
    %v470 = vmax.f32 %v351, 0.0
    %v471 = vmax.f32 %v353, 0.0
    %v472 = vmax.f32 %v424, 0.0
    %v473 = vmax.f32 %v426, 0.0
    %v474 = vmax.f32 %v211, 0.0
    %v475 = vmax.f32 %v213, 0.0
    %v476 = vmax.f32 %v284, 0.0
    %v477 = vmax.f32 %v286, 0.0
    %v478 = vmax.f32 %v357, 0.0
    %v479 = vmax.f32 %v359, 0.0
    %v480 = vmax.f32 %v430, 0.0
    %v481 = vmax.f32 %v432, 0.0
    %v482 = vmax.f32 %v215, 0.0
    %v483 = vmax.f32 %v217, 0.0
    %v484 = vmax.f32 %v288, 0.0
    %v485 = vmax.f32 %v290, 0.0
    %v486 = vmax.f32 %v361, 0.0
    %v487 = vmax.f32 %v363, 0.0
    %v488 = vmax.f32 %v434, 0.0
    %v489 = vmax.f32 %v436, 0.0
    %v490 = vmax.f32 %v221, 0.0
    %v491 = vmax.f32 %v223, 0.0
    %v492 = vmax.f32 %v294, 0.0
    %v493 = vmax.f32 %v296, 0.0
    %v494 = vmax.f32 %v367, 0.0
    %v495 = vmax.f32 %v369, 0.0
    %v496 = vmax.f32 %v440, 0.0
    %v497 = vmax.f32 %v442, 0.0
    %v498 = vmax.f32 %v225, 0.0
    %v499 = vmax.f32 %v227, 0.0
    %v500 = vmax.f32 %v298, 0.0
    %v501 = vmax.f32 %v300, 0.0
    %v502 = vmax.f32 %v371, 0.0
    %v503 = vmax.f32 %v373, 0.0
    %v504 = vmax.f32 %v444, 0.0
    %v505 = vmax.f32 %v446, 0.0
    %v506 = vmax.f32 %v231, 0.0
    %v507 = vmax.f32 %v233, 0.0
    %v508 = vmax.f32 %v304, 0.0
    %v509 = vmax.f32 %v306, 0.0
    %v510 = vmax.f32 %v377, 0.0
    %v511 = vmax.f32 %v379, 0.0
    %v512 = vmax.f32 %v450, 0.0
    %v513 = vmax.f32 %v452, 0.0
    %v514 = vmax.f32 %v235, 0.0
    %v515 = vmax.f32 %v237, 0.0
    %v516 = vmax.f32 %v308, 0.0
    %v517 = vmax.f32 %v310, 0.0
    %v518 = vmax.f32 %v381, 0.0
    %v519 = vmax.f32 %v383, 0.0
    %v520 = vmax.f32 %v454, 0.0
    %v521 = vmax.f32 %v456, 0.0
    %v522 = vld [vmem:[%s3] sm:$0xf]
    %v523 = vld [vmem:[%s3 + $0x4] sm:$0xf]
    %v524 = vld [vmem:[%s3 + $0x8] sm:$0xf]
    %v525 = vld [vmem:[%s3 + $0xc] sm:$0xf]
    %v526 = vpack.c.bf16 %v466, %v458
    %v527 = vpack.c.bf16 %v467, %v459
    %v528 = vpack.c.bf16 %v468, %v460
    %v529 = vpack.c.bf16 %v469, %v461
    %v530 = vpack.c.bf16 %v470, %v462
    %v531 = vpack.c.bf16 %v471, %v463
    %v532 = vpack.c.bf16 %v472, %v464
    %v533 = vpack.c.bf16 %v473, %v465
    %v534 = vpack.c.bf16 %v482, %v474
    %v535 = vpack.c.bf16 %v483, %v475
    %v536 = vpack.c.bf16 %v484, %v476
    %v537 = vpack.c.bf16 %v485, %v477
    %v538 = vpack.c.bf16 %v486, %v478
    %v539 = vpack.c.bf16 %v487, %v479
    %v540 = vpack.c.bf16 %v488, %v480
    %v541 = vpack.c.bf16 %v489, %v481
    %v542 = vpack.c.bf16 %v498, %v490
    %v543 = vpack.c.bf16 %v499, %v491
    %v544 = vpack.c.bf16 %v500, %v492
    %v545 = vpack.c.bf16 %v501, %v493
    %v546 = vpack.c.bf16 %v502, %v494
    %v547 = vpack.c.bf16 %v503, %v495
    %v548 = vpack.c.bf16 %v504, %v496
    %v549 = vpack.c.bf16 %v505, %v497
    %v550 = vpack.c.bf16 %v514, %v506
    %v551 = vpack.c.bf16 %v515, %v507
    %v552 = vpack.c.bf16 %v516, %v508
    %v553 = vpack.c.bf16 %v517, %v509
    %v554 = vpack.c.bf16 %v518, %v510
    %v555 = vpack.c.bf16 %v519, %v511
    %v556 = vpack.c.bf16 %v520, %v512
    %v557 = vpack.c.bf16 %v521, %v513
    %v558 = vld [vmem:[%s4] sm:$0xff]
    %v559 = vld [vmem:[%s4 + $0x8] sm:$0xff]
    %v560 = vld [vmem:[%s4 + $0x10] sm:$0xff]
    %v561 = vld [vmem:[%s4 + $0x18] sm:$0xff]
    %563 = vset.pattern.permute.xlu0 0
    %564 = vperm.xlu0 %563, %v558
    %v565 = vpop.permute.xlu0 %564
    %568 = vset.pattern.permute.xlu0 0
    %569 = vperm.xlu0 %568, %v559
    %v570 = vpop.permute.xlu0 %569
    %573 = vset.pattern.permute.xlu0 0
    %574 = vperm.xlu0 %573, %v560
    %v575 = vpop.permute.xlu0 %574
    %578 = vset.pattern.permute.xlu0 0
    %579 = vperm.xlu0 %578, %v561
    %v580 = vpop.permute.xlu0 %579
    %v586 = vunpack.c.l.b16 %v522
    %v587 = vunpack.c.l.b16 %v523
    %v588 = vunpack.c.l.b16 %v524
    %v589 = vunpack.c.l.b16 %v525
    %v590 = vpack.c.b16 %v587, %v586
    %v591 = vpack.c.b16 %v589, %v588
    %vm592 = vcmask 523264
    %v594 = vsel %vm592, %v590, 0
    %v597 = vsel %vm592, %v591, 0
    %599 = vmatprep.subr.bf16.mxu0 0
    %600 = vmatpush1.bf16.msra.mxu0 0
    %601 = vmatprep.subr.bf16.mxu0 0
    %602 = vmatpush1.bf16.msra.mxu0 0
    %603 = vmatprep.subr.bf16.mxu0 0
    %604 = vmatpush1.bf16.msra.mxu0 0
    %605 = vmatprep.subr.bf16.mxu0 0
    %606 = vmatpush1.bf16.msra.mxu0 0
    %607 = vmatprep.subr.bf16.mxu0 %v551
    %608 = vmatpush1.bf16.msra.mxu0 %v550
    %609 = vmatprep.subr.bf16.mxu0 %v543
    %610 = vmatpush1.bf16.msra.mxu0 %v542
    %611 = vmatprep.subr.bf16.mxu0 %v535
    %612 = vmatpush1.bf16.msra.mxu0 %v534
    %613 = vmatprep.subr.bf16.mxu0 %v527
    %614 = vmatpush1.bf16.msra.mxu0 %v526
    %615 = vmatprep.subr.bf16.mxu0 0
    %616 = vmatpush2.bf16.msra.mxu0 0
    %617 = vmatprep.subr.bf16.mxu0 0
    %618 = vmatpush2.bf16.msra.mxu0 0
    %619 = vmatprep.subr.bf16.mxu0 0
    %620 = vmatpush2.bf16.msra.mxu0 0
    %621 = vmatprep.subr.bf16.mxu0 0
    %622 = vmatpush2.bf16.msra.mxu0 0
    %623 = vmatprep.subr.bf16.mxu0 0
    %624 = vmatpush2.bf16.msra.mxu0 0
    %625 = vmatprep.subr.bf16.mxu0 0
    %626 = vmatpush2.bf16.msra.mxu0 0
    %627 = vmatprep.subr.bf16.mxu0 0
    %628 = vmatpush2.bf16.msra.mxu0 0
    %629 = vmatprep.subr.bf16.mxu0 0
    %630 = vmatpush2.bf16.msra.mxu0 0
    %631 = vmatprep.mubr.bf16.mxu0 0
    %632 = vmatmul.mubr.bf16.gmra.mxu0 %v594
    %v633 = vpop.f32.mrf.mxu0
    %v634 = vadd.f32 %v565, %v633
    %v635 = vpop.f32.mrf.mxu0
    %v636 = vadd.f32 %v565, %v635
    %v637 = vpop.f32.mrf.mxu0
    %v638 = vadd.f32 %v570, %v637
    %v639 = vpop.f32.mrf.mxu0
    %v640 = vadd.f32 %v570, %v639
    %641 = vmatprep.mubr.bf16.mxu0 0
    %642 = vmatmul.mubr.bf16.gmra.mxu0 %v597
    %v643 = vpop.f32.mrf.mxu0
    %v644 = vadd.f32 %v575, %v643
    %v645 = vpop.f32.mrf.mxu0
    %v646 = vadd.f32 %v575, %v645
    %v647 = vpop.f32.mrf.mxu0
    %v648 = vadd.f32 %v580, %v647
    %v649 = vpop.f32.mrf.mxu0
    %v650 = vadd.f32 %v580, %v649
    %651 = vdwg.mxu0
    %652 = vmatprep.subr.bf16.mxu0 0
    %653 = vmatpush1.bf16.msra.mxu0 0
    %654 = vmatprep.subr.bf16.mxu0 0
    %655 = vmatpush1.bf16.msra.mxu0 0
    %656 = vmatprep.subr.bf16.mxu0 0
    %657 = vmatpush1.bf16.msra.mxu0 0
    %658 = vmatprep.subr.bf16.mxu0 0
    %659 = vmatpush1.bf16.msra.mxu0 0
    %660 = vmatprep.subr.bf16.mxu0 %v553
    %661 = vmatpush1.bf16.msra.mxu0 %v552
    %662 = vmatprep.subr.bf16.mxu0 %v545
    %663 = vmatpush1.bf16.msra.mxu0 %v544
    %664 = vmatprep.subr.bf16.mxu0 %v537
    %665 = vmatpush1.bf16.msra.mxu0 %v536
    %666 = vmatprep.subr.bf16.mxu0 %v529
    %667 = vmatpush1.bf16.msra.mxu0 %v528
    %668 = vmatprep.subr.bf16.mxu0 0
    %669 = vmatpush2.bf16.msra.mxu0 0
    %670 = vmatprep.subr.bf16.mxu0 0
    %671 = vmatpush2.bf16.msra.mxu0 0
    %672 = vmatprep.subr.bf16.mxu0 0
    %673 = vmatpush2.bf16.msra.mxu0 0
    %674 = vmatprep.subr.bf16.mxu0 0
    %675 = vmatpush2.bf16.msra.mxu0 0
    %676 = vmatprep.subr.bf16.mxu0 0
    %677 = vmatpush2.bf16.msra.mxu0 0
    %678 = vmatprep.subr.bf16.mxu0 0
    %679 = vmatpush2.bf16.msra.mxu0 0
    %680 = vmatprep.subr.bf16.mxu0 0
    %681 = vmatpush2.bf16.msra.mxu0 0
    %682 = vmatprep.subr.bf16.mxu0 0
    %683 = vmatpush2.bf16.msra.mxu0 0
    %684 = vmatprep.mubr.bf16.mxu0 0
    %685 = vmatmul.mubr.bf16.gmra.mxu0 %v594
    %v686 = vpop.f32.mrf.mxu0
    %v687 = vadd.f32 %v565, %v686
    %v688 = vpop.f32.mrf.mxu0
    %v689 = vadd.f32 %v565, %v688
    %v690 = vpop.f32.mrf.mxu0
    %v691 = vadd.f32 %v570, %v690
    %v692 = vpop.f32.mrf.mxu0
    %v693 = vadd.f32 %v570, %v692
    %694 = vmatprep.mubr.bf16.mxu0 0
    %695 = vmatmul.mubr.bf16.gmra.mxu0 %v597
    %v696 = vpop.f32.mrf.mxu0
    %v697 = vadd.f32 %v575, %v696
    %v698 = vpop.f32.mrf.mxu0
    %v699 = vadd.f32 %v575, %v698
    %v700 = vpop.f32.mrf.mxu0
    %v701 = vadd.f32 %v580, %v700
    %v702 = vpop.f32.mrf.mxu0
    %v703 = vadd.f32 %v580, %v702
    %704 = vdwg.mxu0
    %705 = vmatprep.subr.bf16.mxu0 0
    %706 = vmatpush1.bf16.msra.mxu0 0
    %707 = vmatprep.subr.bf16.mxu0 0
    %708 = vmatpush1.bf16.msra.mxu0 0
    %709 = vmatprep.subr.bf16.mxu0 0
    %710 = vmatpush1.bf16.msra.mxu0 0
    %711 = vmatprep.subr.bf16.mxu0 0
    %712 = vmatpush1.bf16.msra.mxu0 0
    %713 = vmatprep.subr.bf16.mxu0 %v555
    %714 = vmatpush1.bf16.msra.mxu0 %v554
    %715 = vmatprep.subr.bf16.mxu0 %v547
    %716 = vmatpush1.bf16.msra.mxu0 %v546
    %717 = vmatprep.subr.bf16.mxu0 %v539
    %718 = vmatpush1.bf16.msra.mxu0 %v538
    %719 = vmatprep.subr.bf16.mxu0 %v531
    %720 = vmatpush1.bf16.msra.mxu0 %v530
    %721 = vmatprep.subr.bf16.mxu0 0
    %722 = vmatpush2.bf16.msra.mxu0 0
    %723 = vmatprep.subr.bf16.mxu0 0
    %724 = vmatpush2.bf16.msra.mxu0 0
    %725 = vmatprep.subr.bf16.mxu0 0
    %726 = vmatpush2.bf16.msra.mxu0 0
    %727 = vmatprep.subr.bf16.mxu0 0
    %728 = vmatpush2.bf16.msra.mxu0 0
    %729 = vmatprep.subr.bf16.mxu0 0
    %730 = vmatpush2.bf16.msra.mxu0 0
    %731 = vmatprep.subr.bf16.mxu0 0
    %732 = vmatpush2.bf16.msra.mxu0 0
    %733 = vmatprep.subr.bf16.mxu0 0
    %734 = vmatpush2.bf16.msra.mxu0 0
    %735 = vmatprep.subr.bf16.mxu0 0
    %736 = vmatpush2.bf16.msra.mxu0 0
    %737 = vmatprep.mubr.bf16.mxu0 0
    %738 = vmatmul.mubr.bf16.gmra.mxu0 %v594
    %v739 = vpop.f32.mrf.mxu0
    %v740 = vadd.f32 %v565, %v739
    %v741 = vpop.f32.mrf.mxu0
    %v742 = vadd.f32 %v565, %v741
    %v743 = vpop.f32.mrf.mxu0
    %v744 = vadd.f32 %v570, %v743
    %v745 = vpop.f32.mrf.mxu0
    %v746 = vadd.f32 %v570, %v745
    %747 = vmatprep.mubr.bf16.mxu0 0
    %748 = vmatmul.mubr.bf16.gmra.mxu0 %v597
    %v749 = vpop.f32.mrf.mxu0
    %v750 = vadd.f32 %v575, %v749
    %v751 = vpop.f32.mrf.mxu0
    %v752 = vadd.f32 %v575, %v751
    %v753 = vpop.f32.mrf.mxu0
    %v754 = vadd.f32 %v580, %v753
    %v755 = vpop.f32.mrf.mxu0
    %v756 = vadd.f32 %v580, %v755
    %757 = vdwg.mxu0
    %758 = vmatprep.subr.bf16.mxu0 0
    %759 = vmatpush1.bf16.msra.mxu0 0
    %760 = vmatprep.subr.bf16.mxu0 0
    %761 = vmatpush1.bf16.msra.mxu0 0
    %762 = vmatprep.subr.bf16.mxu0 0
    %763 = vmatpush1.bf16.msra.mxu0 0
    %764 = vmatprep.subr.bf16.mxu0 0
    %765 = vmatpush1.bf16.msra.mxu0 0
    %766 = vmatprep.subr.bf16.mxu0 %v557
    %767 = vmatpush1.bf16.msra.mxu0 %v556
    %768 = vmatprep.subr.bf16.mxu0 %v549
    %769 = vmatpush1.bf16.msra.mxu0 %v548
    %770 = vmatprep.subr.bf16.mxu0 %v541
    %771 = vmatpush1.bf16.msra.mxu0 %v540
    %772 = vmatprep.subr.bf16.mxu0 %v533
    %773 = vmatpush1.bf16.msra.mxu0 %v532
    %774 = vmatprep.subr.bf16.mxu0 0
    %775 = vmatpush2.bf16.msra.mxu0 0
    %776 = vmatprep.subr.bf16.mxu0 0
    %777 = vmatpush2.bf16.msra.mxu0 0
    %778 = vmatprep.subr.bf16.mxu0 0
    %779 = vmatpush2.bf16.msra.mxu0 0
    %780 = vmatprep.subr.bf16.mxu0 0
    %781 = vmatpush2.bf16.msra.mxu0 0
    %782 = vmatprep.subr.bf16.mxu0 0
    %783 = vmatpush2.bf16.msra.mxu0 0
    %784 = vmatprep.subr.bf16.mxu0 0
    %785 = vmatpush2.bf16.msra.mxu0 0
    %786 = vmatprep.subr.bf16.mxu0 0
    %787 = vmatpush2.bf16.msra.mxu0 0
    %788 = vmatprep.subr.bf16.mxu0 0
    %789 = vmatpush2.bf16.msra.mxu0 0
    %790 = vmatprep.mubr.bf16.mxu0 0
    %791 = vmatmul.mubr.bf16.gmra.mxu0 %v594
    %v792 = vpop.f32.mrf.mxu0
    %v793 = vadd.f32 %v565, %v792
    %v794 = vpop.f32.mrf.mxu0
    %v795 = vadd.f32 %v565, %v794
    %v796 = vpop.f32.mrf.mxu0
    %v797 = vadd.f32 %v570, %v796
    %v798 = vpop.f32.mrf.mxu0
    %v799 = vadd.f32 %v570, %v798
    %800 = vmatprep.mubr.bf16.mxu0 0
    %801 = vmatmul.mubr.bf16.gmra.mxu0 %v597
    %v802 = vpop.f32.mrf.mxu0
    %v803 = vadd.f32 %v575, %v802
    %v804 = vpop.f32.mrf.mxu0
    %v805 = vadd.f32 %v575, %v804
    %v806 = vpop.f32.mrf.mxu0
    %v807 = vadd.f32 %v580, %v806
    %v808 = vpop.f32.mrf.mxu0
    %v809 = vadd.f32 %v580, %v808
    %810 = vdwg.mxu0
    %v811 = vmax.f32 %v634, 0.0
    %v812 = vmax.f32 %v636, 0.0
    %v813 = vmax.f32 %v687, 0.0
    %v814 = vmax.f32 %v689, 0.0
    %v815 = vmax.f32 %v740, 0.0
    %v816 = vmax.f32 %v742, 0.0
    %v817 = vmax.f32 %v793, 0.0
    %v818 = vmax.f32 %v795, 0.0
    %v819 = vmax.f32 %v638, 0.0
    %v820 = vmax.f32 %v640, 0.0
    %v821 = vmax.f32 %v691, 0.0
    %v822 = vmax.f32 %v693, 0.0
    %v823 = vmax.f32 %v744, 0.0
    %v824 = vmax.f32 %v746, 0.0
    %v825 = vmax.f32 %v797, 0.0
    %v826 = vmax.f32 %v799, 0.0
    %v827 = vmax.f32 %v644, 0.0
    %v828 = vmax.f32 %v646, 0.0
    %v829 = vmax.f32 %v697, 0.0
    %v830 = vmax.f32 %v699, 0.0
    %v831 = vmax.f32 %v750, 0.0
    %v832 = vmax.f32 %v752, 0.0
    %v833 = vmax.f32 %v803, 0.0
    %v834 = vmax.f32 %v805, 0.0
    %v835 = vmax.f32 %v648, 0.0
    %v836 = vmax.f32 %v650, 0.0
    %v837 = vmax.f32 %v701, 0.0
    %v838 = vmax.f32 %v703, 0.0
    %v839 = vmax.f32 %v754, 0.0
    %v840 = vmax.f32 %v756, 0.0
    %v841 = vmax.f32 %v807, 0.0
    %v842 = vmax.f32 %v809, 0.0
    %v843 = vld [vmem:[%s5] sm:$0xff]
    %v844 = vld [vmem:[%s5 + $0x8] sm:$0xff]
    %v845 = vld [vmem:[%s5 + $0x10] sm:$0xff]
    %v846 = vld [vmem:[%s5 + $0x18] sm:$0xff]
    %848 = vset.pattern.permute.xlu0 0
    %849 = vperm.xlu0 %848, %v843
    %v850 = vpop.permute.xlu0 %849
    %853 = vset.pattern.permute.xlu0 0
    %854 = vperm.xlu0 %853, %v844
    %v855 = vpop.permute.xlu0 %854
    %858 = vset.pattern.permute.xlu0 0
    %859 = vperm.xlu0 %858, %v845
    %v860 = vpop.permute.xlu0 %859
    %863 = vset.pattern.permute.xlu0 0
    %864 = vperm.xlu0 %863, %v846
    %v865 = vpop.permute.xlu0 %864
    %v867 = vmul.f32 %v811, %v850
    %v868 = vmul.f32 %v812, %v850
    %v869 = vmul.f32 %v813, %v850
    %v870 = vmul.f32 %v814, %v850
    %v871 = vmul.f32 %v815, %v850
    %v872 = vmul.f32 %v816, %v850
    %v873 = vmul.f32 %v817, %v850
    %v874 = vmul.f32 %v818, %v850
    %v875 = vmul.f32 %v819, %v855
    %v876 = vmul.f32 %v820, %v855
    %v877 = vmul.f32 %v821, %v855
    %v878 = vmul.f32 %v822, %v855
    %v879 = vmul.f32 %v823, %v855
    %v880 = vmul.f32 %v824, %v855
    %v881 = vmul.f32 %v825, %v855
    %v882 = vmul.f32 %v826, %v855
    %v883 = vmul.f32 %v827, %v860
    %v884 = vmul.f32 %v828, %v860
    %v885 = vmul.f32 %v829, %v860
    %v886 = vmul.f32 %v830, %v860
    %v887 = vmul.f32 %v831, %v860
    %v888 = vmul.f32 %v832, %v860
    %v889 = vmul.f32 %v833, %v860
    %v890 = vmul.f32 %v834, %v860
    %v891 = vmul.f32 %v835, %v865
    %v892 = vmul.f32 %v836, %v865
    %v893 = vmul.f32 %v837, %v865
    %v894 = vmul.f32 %v838, %v865
    %v895 = vmul.f32 %v839, %v865
    %v896 = vmul.f32 %v840, %v865
    %v897 = vmul.f32 %v841, %v865
    %v898 = vmul.f32 %v842, %v865
    %v899 = vadd.f32 %v867, %v875
    %v900 = vadd.f32 %v899, %v883
    %v901 = vadd.f32 %v900, %v891
    %v902 = vrot.slane %v901, 4
    %v903 = vadd.f32 %v901, %v902
    %v904 = vrot.slane %v903, 2
    %v905 = vadd.f32 %v903, %v904
    %v906 = vrot.slane %v905, 1
    %v907 = vadd.f32 %v905, %v906
    %v908 = vadd.f32 %v868, %v876
    %v909 = vadd.f32 %v908, %v884
    %v910 = vadd.f32 %v909, %v892
    %v911 = vrot.slane %v910, 4
    %v912 = vadd.f32 %v910, %v911
    %v913 = vrot.slane %v912, 2
    %v914 = vadd.f32 %v912, %v913
    %v915 = vrot.slane %v914, 1
    %v916 = vadd.f32 %v914, %v915
    %v917 = vadd.f32 %v869, %v877
    %v918 = vadd.f32 %v917, %v885
    %v919 = vadd.f32 %v918, %v893
    %v920 = vrot.slane %v919, 4
    %v921 = vadd.f32 %v919, %v920
    %v922 = vrot.slane %v921, 2
    %v923 = vadd.f32 %v921, %v922
    %v924 = vrot.slane %v923, 1
    %v925 = vadd.f32 %v923, %v924
    %v926 = vadd.f32 %v870, %v878
    %v927 = vadd.f32 %v926, %v886
    %v928 = vadd.f32 %v927, %v894
    %v929 = vrot.slane %v928, 4
    %v930 = vadd.f32 %v928, %v929
    %v931 = vrot.slane %v930, 2
    %v932 = vadd.f32 %v930, %v931
    %v933 = vrot.slane %v932, 1
    %v934 = vadd.f32 %v932, %v933
    %v935 = vadd.f32 %v871, %v879
    %v936 = vadd.f32 %v935, %v887
    %v937 = vadd.f32 %v936, %v895
    %v938 = vrot.slane %v937, 4
    %v939 = vadd.f32 %v937, %v938
    %v940 = vrot.slane %v939, 2
    %v941 = vadd.f32 %v939, %v940
    %v942 = vrot.slane %v941, 1
    %v943 = vadd.f32 %v941, %v942
    %v944 = vadd.f32 %v872, %v880
    %v945 = vadd.f32 %v944, %v888
    %v946 = vadd.f32 %v945, %v896
    %v947 = vrot.slane %v946, 4
    %v948 = vadd.f32 %v946, %v947
    %v949 = vrot.slane %v948, 2
    %v950 = vadd.f32 %v948, %v949
    %v951 = vrot.slane %v950, 1
    %v952 = vadd.f32 %v950, %v951
    %v953 = vadd.f32 %v873, %v881
    %v954 = vadd.f32 %v953, %v889
    %v955 = vadd.f32 %v954, %v897
    %v956 = vrot.slane %v955, 4
    %v957 = vadd.f32 %v955, %v956
    %v958 = vrot.slane %v957, 2
    %v959 = vadd.f32 %v957, %v958
    %v960 = vrot.slane %v959, 1
    %v961 = vadd.f32 %v959, %v960
    %v962 = vadd.f32 %v874, %v882
    %v963 = vadd.f32 %v962, %v890
    %v964 = vadd.f32 %v963, %v898
    %v965 = vrot.slane %v964, 4
    %v966 = vadd.f32 %v964, %v965
    %v967 = vrot.slane %v966, 2
    %v968 = vadd.f32 %v966, %v967
    %v969 = vrot.slane %v968, 1
    %v970 = vadd.f32 %v968, %v969
    %s971 = sld [smem:[#allocation2]]
    %v972 = vstv %s971
    %v973 = vadd.f32 %v907, %v972
    %v974 = vadd.f32 %v916, %v972
    %v975 = vadd.f32 %v925, %v972
    %v976 = vadd.f32 %v934, %v972
    %v977 = vadd.f32 %v943, %v972
    %v978 = vadd.f32 %v952, %v972
    %v979 = vadd.f32 %v961, %v972
    %v980 = vadd.f32 %v970, %v972
    %v989 = vcombine.low %v973, %v974
    %v990 = vcombine.low %v975, %v976
    %v991 = vcombine.low %v977, %v978
    %v992 = vcombine.low %v979, %v980
    %v994 = vunpack.c.l.s4 1966171168
    %v995 = vunpack.c.0.s8 %v994
    %v996 = vlaneseq
    %v997 = vshrl.u32 %v996, 7
    %v998 = vsub.s32 %v995, %v997
    %v999 = vrot.slane %v989, %v998
    %v1001 = vunpack.c.l.s4 1966171168
    %v1002 = vunpack.c.0.s8 %v1001
    %v1003 = vlaneseq
    %v1004 = vshrl.u32 %v1003, 7
    %v1005 = vsub.s32 %v1002, %v1004
    %v1006 = vrot.slane %v990, %v1005
    %v1008 = vunpack.c.l.s4 1966171168
    %v1009 = vunpack.c.0.s8 %v1008
    %v1010 = vlaneseq
    %v1011 = vshrl.u32 %v1010, 7
    %v1012 = vsub.s32 %v1009, %v1011
    %v1013 = vrot.slane %v991, %v1012
    %v1015 = vunpack.c.l.s4 1966171168
    %v1016 = vunpack.c.0.s8 %v1015
    %v1017 = vlaneseq
    %v1018 = vshrl.u32 %v1017, 7
    %v1019 = vsub.s32 %v1016, %v1018
    %v1020 = vrot.slane %v992, %v1019
    %v1021 = vcombine.low %v999, %v1006
    %v1022 = vcombine.low %v1013, %v1020
    %v1024 = vunpack.c.l.s4 1966171168
    %v1025 = vunpack.c.0.s8 %v1024
    %v1026 = vlaneseq
    %v1027 = vshrl.u32 %v1026, 7
    %v1028 = vsub.s32 %v1025, %v1027
    %v1029 = vrot.slane %v1021, %v1028
    %v1031 = vunpack.c.l.s4 1966171168
    %v1032 = vunpack.c.0.s8 %v1031
    %v1033 = vlaneseq
    %v1034 = vshrl.u32 %v1033, 7
    %v1035 = vsub.s32 %v1032, %v1034
    %v1036 = vrot.slane %v1022, %v1035
    %v1037 = vcombine.low %v1029, %v1036
    %1039 = vst [vmem:[#allocation3] sm:$0xff] %v1037
    // Predicated region
    $region30: #{tpu_custom_call.1} parent=1 // pred_check
      _
    $region31: #{tpu_custom_call.1} parent=1 // pred_check_branch
      %1041 = sbr.rel (0) target = $region33
    $region32: #{tpu_custom_call.1} parent=1 // pred_region
      %s1043 = ssub.s32 128, 128
      %1044 = vsyncadd [#allocation4], %s1043
      %s1046 = sshll.u32 [#allocation3], 4
      %s1047 = int_to_ptr.vmem [resolvable:$true] %s1046
      %1049 = dma.vmem_to_hbm [thread:$0]  %s1047, 128, %s7, [#allocation4]
    $region33: #{tpu_custom_call.1} parent=1 // pred_fallthru
      _
    // Predicated region
    $region34: #{tpu_custom_call.1} parent=1 // pred_check
      _
    $region35: #{tpu_custom_call.1} parent=1 // pred_check_branch
      %1051 = sbr.rel (0) target = $region37
    $region36: #{tpu_custom_call.1} parent=1 // pred_region
      %1052 = dma.done [#allocation4], 128
    $region37: #{tpu_custom_call.1} parent=1 // pred_fallthru
      _
    %1053 = vsyncpa [#allocation4], 1

</llo_original>
